<compile_context>
chip_gen: v7x
topology: tpu7x:2x2x1
jax: 0.10.0
libtpu: 0.0.40
codegen_flags: <defaults>
</compile_context>

<pallas_src>
import functools
import math

import numpy as np
import jax
import jax.numpy as jnp
from jax import lax
from jax.experimental import pallas as pl
from jax.experimental.pallas import tpu as pltpu  # noqa: F401  (TPU backend)


def _loss_kernel(xc_ref, xr_ref, tc_ref, tr_ref, out_ref, *, n, temperature, lmbd):
    f32 = jnp.float32
    T = float(temperature)
    inv_t = 1.0 / T
    ln_t = math.log(T)
    t_pow = T ** (n - 1)            # per-k-sweep decay of the carry S
    ln_tp = (n - 1) * ln_t

    x_col = xc_ref[...]             # (n, 1) inputs
    x_row = xr_ref[...]             # (1, n) inputs (lane-dense)
    t_col = tc_ref[...]             # (n, 1) targets
    t_row = tr_ref[...]             # (1, n) targets

    ii = lax.broadcasted_iota(jnp.int32, (n, n), 0)   # sublane index
    jj = lax.broadcasted_iota(jnp.int32, (n, n), 1)   # lane index
    iif = ii.astype(f32)
    jjf = jj.astype(f32)
    offdiag = ii != jj

    # ---- pairwise quantities (symmetric), VPU outer products, no MXU -------
    g = x_col * x_row                                  # g[i,k] = x_i * x_k
    same = t_col == t_row                              # same-label mask
    mask = jnp.logical_and(same, offdiag)              # qualifying (i, j) pairs
    same_f = jnp.where(same, 1.0, 0.0).astype(f32)

    cnt_col = jnp.sum(same_f, axis=1, keepdims=True)   # (n,1) label count (incl. self)
    cnt_row = jnp.sum(same_f, axis=0, keepdims=True)   # (1,n)
    m_col = cnt_col - 1.0                              # matches per row
    m_row = cnt_row - 1.0

    # ---- temperature-power weights of the k-sweep, built in-kernel ---------
    expo_w = jnp.where(jj < ii, (n - 1) - jjf, n - jjf)            # w[i,k]
    w = jnp.where(offdiag, jnp.exp(expo_w * ln_t), 0.0)
    expo_wt = jnp.where(ii < jj, (n - 1) - iif, n - iif)           # wT[k,i] = w[i,k]
    wt = jnp.where(offdiag, jnp.exp(expo_wt * ln_t), 0.0)

    a_col = jnp.sum(g * w, axis=1, keepdims=True)      # (n,1)  a_i
    a_row = jnp.sum(g * wt, axis=0, keepdims=True)     # (1,n)  a_i (lane-oriented)

    # ---- geometric-series helpers on t_pow ----------------------------------
    q_row = lax.broadcasted_iota(jnp.int32, (1, n), 1).astype(f32)   # q = p - 1
    p_row = q_row + 1.0
    tp_p_row = jnp.exp(p_row * ln_tp)                  # t_pow**p, p = 1..n
    tp_m_row = jnp.exp(m_row * ln_tp)                  # t_pow**m_i
    if t_pow != 1.0:
        geom_p_row = (tp_p_row - 1.0) / (t_pow - 1.0)  # 1 + t_pow + ... + t_pow**(p-1)
        geom_m_row = (tp_m_row - 1.0) / (t_pow - 1.0)
    else:
        geom_p_row = p_row
        geom_m_row = m_row

    # ---- carry of sum_of_dot_product into each row, fully vectorized --------
    # C_{i+1} = C_i * t_pow**m_i + a_i*geom(m_i)
    #   =>  C_i = sum_{r<i} d_r * t_pow**(M_i - M_{r+1}),  d_r = a_r*geom(m_r),
    #       M_i = sum_{s<i} m_s  (exclusive prefix sums via triangular masks).
    lt_f = jnp.where(jj < ii, 1.0, 0.0).astype(f32)                # r < i (r on lanes)
    M_col = jnp.sum(lt_f * m_row, axis=1, keepdims=True)           # (n,1)
    ut_f = jnp.where(ii < jj, 1.0, 0.0).astype(f32)                # s < r (s on sublanes)
    M_row = jnp.sum(ut_f * m_col, axis=0, keepdims=True)           # (1,n)

    d_row = a_row * geom_m_row                                     # (1,n)
    E = M_col - M_row - m_row                                      # M_i - M_{r+1}
    E_safe = jnp.where(jj < ii, E, 0.0)                # mask BEFORE exp (avoid inf*0)
    w2 = jnp.where(jj < ii, jnp.exp(E_safe * ln_tp), 0.0)
    C_col = jnp.sum(w2 * d_row, axis=1, keepdims=True)             # (n,1)

    # ---- per-row log-softmax sums, one vectorized EUP pass each -------------
    s_cand = C_col * tp_p_row + a_col * geom_p_row                 # (n,n): S_p
    valid = q_row < m_col                                          # p <= m_i
    sum_log_s = jnp.sum(jnp.log(jnp.where(valid, s_cand, 1.0)),
                        axis=1, keepdims=True)                     # (n,1)
    sum_log_dp = jnp.sum(jnp.log(jnp.where(mask, g * inv_t, 1.0)),
                         axis=1, keepdims=True)                    # (n,1)
    row_L = sum_log_dp - sum_log_s                                 # ΔL of row i

    # ---- sc_subloss: SC = sum_i -L_cum_i/(cnt_i-1) = -sum_r row_L_r * R_r ---
    # (L is cumulative across rows in the PyTorch code; R_r = sum_{i>=r} 1/(cnt_i-1).)
    # TODO(synk): a label occurring exactly once makes PyTorch raise
    # (missing `sce_subloss`); here it would silently yield inf/NaN instead.
    inv_cm1_row = 1.0 / m_row                                      # (1,n)
    ge_f = jnp.where(jj >= ii, 1.0, 0.0).astype(f32)               # i >= r
    R_col = jnp.sum(ge_f * inv_cm1_row, axis=1, keepdims=True)     # (n,1)
    sc = -jnp.sum(row_L * R_col, axis=0, keepdims=True)            # (1,1)

    # nn.CrossEntropyLoss on (N,1) logits with (N,1) probability targets is
    # identically 0 (log_softmax over a single class == 0).
    celoss = 0.0
    out_ref[...] = (1.0 - lmbd) * celoss + lmbd * sc


def ce_and_sc_loss_for_kobert(inputs, targets, temperature=0.5, lmbd=0.5):
    if temperature <= 0:
        raise ValueError(f"Must input value larger than 0 (got {temperature})")
    n = int(inputs.shape[0])

    x = inputs.astype(jnp.float32)
    t = targets.astype(jnp.float32)
    x_col = x.reshape(n, 1)
    x_row = x.reshape(1, n)
    t_col = t.reshape(n, 1)
    t_row = t.reshape(1, n)

    kernel = functools.partial(
        _loss_kernel, n=n, temperature=float(temperature), lmbd=float(lmbd))

    # Single invocation, whole arrays resident in VMEM (inputs total ~4*n*16 B).
    out = pl.pallas_call(
        kernel,
        out_shape=jax.ShapeDtypeStruct((1, 1), jnp.float32),
    )(x_col, x_row, t_col, t_row)
    return out[0, 0]


def _reference_loss(x, t, temperature=0.5, lmbd=0.5):
    """Literal float64 re-execution of the (runnable path of the) PyTorch code."""
    n = x.shape[0]
    S = 0.0
    L = 0.0
    SC = 0.0
    for i in range(n):
        for j in range(n):
            if i == j:
                continue
            if t[i] != t[j]:
                continue
            for k in range(n):
                if i == k:
                    continue
                S += float(x[i]) * float(x[k])
                S *= temperature
            dp = float(x[i]) * float(x[j]) / temperature
            L += math.log(dp / S)
        cnt = int(np.sum(t == t[i]))
        SC += -L / (cnt - 1)
    ce = 0.0  # CrossEntropyLoss degenerates to 0 for (N,1) logits / prob targets
    return (1.0 - lmbd) * ce + lmbd * SC


if __name__ == "__main__":
    key = jax.random.PRNGKey(0)
    n = 8
    # Positive values keep every log() argument in-domain (the reference uses
    # math.log); each label appears twice so label_count >= 2 always holds.
    x = jax.random.uniform(key, (n,), jnp.float32, minval=0.5, maxval=1.5)
    target = jnp.array([0.0, 0.0, 1.0, 1.0, 2.0, 2.0, 3.0, 3.0], jnp.float32)

    loss = ce_and_sc_loss_for_kobert(x, target, temperature=0.5, lmbd=0.5)
    loss = jax.block_until_ready(loss)

    ref = _reference_loss(np.asarray(x, np.float64), np.asarray(target, np.float64))
    np.testing.assert_allclose(float(loss), ref, rtol=5e-3, atol=1e-3)
    print("KERNEL_OK")
</pallas_src>

<mosaic_0001>
module attributes {stable_mosaic.version = 11 : i64} {
  func.func @_loss_kernel(%arg0: memref<8x1xf32, #tpu.memory_space<vmem>>, %arg1: memref<1x8xf32, #tpu.memory_space<vmem>>, %arg2: memref<8x1xf32, #tpu.memory_space<vmem>>, %arg3: memref<1x8xf32, #tpu.memory_space<vmem>>, %arg4: memref<1x1xf32, #tpu.memory_space<vmem>>) attributes {dimension_semantics = [], scalar_prefetch = 0 : i64, scratch_operands = 0 : i64, tpu.core_type = #tpu.core_type<tc>} {
    %c0 = arith.constant 0 : index
    %c0_0 = arith.constant 0 : index
    %0 = vector.load %arg0[%c0, %c0_0] : memref<8x1xf32, #tpu.memory_space<vmem>>, vector<8x1xf32>
    %c0_1 = arith.constant 0 : index
    %c0_2 = arith.constant 0 : index
    %1 = vector.load %arg1[%c0_1, %c0_2] : memref<1x8xf32, #tpu.memory_space<vmem>>, vector<1x8xf32>
    %c0_3 = arith.constant 0 : index
    %c0_4 = arith.constant 0 : index
    %2 = vector.load %arg2[%c0_3, %c0_4] : memref<8x1xf32, #tpu.memory_space<vmem>>, vector<8x1xf32>
    %c0_5 = arith.constant 0 : index
    %c0_6 = arith.constant 0 : index
    %3 = vector.load %arg3[%c0_5, %c0_6] : memref<1x8xf32, #tpu.memory_space<vmem>>, vector<1x8xf32>
    %4 = tpu.iota {dimensions = array<i32: 0>} : vector<8x8xi32>
    %5 = tpu.iota {dimensions = array<i32: 1>} : vector<8x8xi32>
    %6 = arith.sitofp %4 : vector<8x8xi32> to vector<8x8xf32>
    %7 = arith.sitofp %5 : vector<8x8xi32> to vector<8x8xf32>
    %8 = arith.cmpi ne, %4, %5 : vector<8x8xi32>
    %9 = vector.broadcast %0 : vector<8x1xf32> to vector<8x8xf32>
    %10 = vector.broadcast %1 : vector<1x8xf32> to vector<8x8xf32>
    %11 = arith.mulf %9, %10 : vector<8x8xf32>
    %12 = vector.broadcast %2 : vector<8x1xf32> to vector<8x8xf32>
    %13 = vector.broadcast %3 : vector<1x8xf32> to vector<8x8xf32>
    %14 = arith.cmpf oeq, %12, %13 : vector<8x8xf32>
    %15 = arith.andi %14, %8 : vector<8x8xi1>
    %cst = arith.constant 1.000000e+00 : f32
    %cst_7 = arith.constant 0.000000e+00 : f32
    %16 = vector.broadcast %cst : f32 to vector<8x8xf32>
    %17 = vector.broadcast %cst_7 : f32 to vector<8x8xf32>
    %18 = arith.select %14, %16, %17 : vector<8x8xi1>, vector<8x8xf32>
    %cst_8 = arith.constant dense<0.000000e+00> : vector<8xf32>
    %19 = vector.multi_reduction <add>, %18, %cst_8 [1] : vector<8x8xf32> to vector<8xf32>
    %20 = vector.shape_cast %19 : vector<8xf32> to vector<8x1xf32>
    %cst_9 = arith.constant dense<0.000000e+00> : vector<8xf32>
    %21 = vector.multi_reduction <add>, %18, %cst_9 [0] : vector<8x8xf32> to vector<8xf32>
    %22 = vector.shape_cast %21 : vector<8xf32> to vector<1x8xf32>
    %cst_10 = arith.constant 1.000000e+00 : f32
    %23 = vector.broadcast %cst_10 : f32 to vector<8x1xf32>
    %24 = arith.subf %20, %23 : vector<8x1xf32>
    %cst_11 = arith.constant 1.000000e+00 : f32
    %25 = vector.broadcast %cst_11 : f32 to vector<1x8xf32>
    %26 = arith.subf %22, %25 : vector<1x8xf32>
    %27 = arith.cmpi slt, %5, %4 : vector<8x8xi32>
    %cst_12 = arith.constant 7.000000e+00 : f32
    %28 = vector.broadcast %cst_12 : f32 to vector<8x8xf32>
    %29 = arith.subf %28, %7 : vector<8x8xf32>
    %cst_13 = arith.constant 8.000000e+00 : f32
    %30 = vector.broadcast %cst_13 : f32 to vector<8x8xf32>
    %31 = arith.subf %30, %7 : vector<8x8xf32>
    %32 = arith.select %27, %29, %31 : vector<8x8xi1>, vector<8x8xf32>
    %cst_14 = arith.constant -0.693147182 : f32
    %33 = vector.broadcast %cst_14 : f32 to vector<8x8xf32>
    %34 = arith.mulf %32, %33 : vector<8x8xf32>
    %35 = math.exp %34 : vector<8x8xf32>
    %cst_15 = arith.constant 0.000000e+00 : f32
    %36 = vector.broadcast %cst_15 : f32 to vector<8x8xf32>
    %37 = arith.select %8, %35, %36 : vector<8x8xi1>, vector<8x8xf32>
    %38 = arith.cmpi slt, %4, %5 : vector<8x8xi32>
    %cst_16 = arith.constant 7.000000e+00 : f32
    %39 = vector.broadcast %cst_16 : f32 to vector<8x8xf32>
    %40 = arith.subf %39, %6 : vector<8x8xf32>
    %cst_17 = arith.constant 8.000000e+00 : f32
    %41 = vector.broadcast %cst_17 : f32 to vector<8x8xf32>
    %42 = arith.subf %41, %6 : vector<8x8xf32>
    %43 = arith.select %38, %40, %42 : vector<8x8xi1>, vector<8x8xf32>
    %cst_18 = arith.constant -0.693147182 : f32
    %44 = vector.broadcast %cst_18 : f32 to vector<8x8xf32>
    %45 = arith.mulf %43, %44 : vector<8x8xf32>
    %46 = math.exp %45 : vector<8x8xf32>
    %cst_19 = arith.constant 0.000000e+00 : f32
    %47 = vector.broadcast %cst_19 : f32 to vector<8x8xf32>
    %48 = arith.select %8, %46, %47 : vector<8x8xi1>, vector<8x8xf32>
    %49 = arith.mulf %11, %37 : vector<8x8xf32>
    %cst_20 = arith.constant dense<0.000000e+00> : vector<8xf32>
    %50 = vector.multi_reduction <add>, %49, %cst_20 [1] : vector<8x8xf32> to vector<8xf32>
    %51 = vector.shape_cast %50 : vector<8xf32> to vector<8x1xf32>
    %52 = arith.mulf %11, %48 : vector<8x8xf32>
    %cst_21 = arith.constant dense<0.000000e+00> : vector<8xf32>
    %53 = vector.multi_reduction <add>, %52, %cst_21 [0] : vector<8x8xf32> to vector<8xf32>
    %54 = vector.shape_cast %53 : vector<8xf32> to vector<1x8xf32>
    %55 = tpu.iota {dimensions = array<i32: 1>} : vector<1x8xi32>
    %56 = arith.sitofp %55 : vector<1x8xi32> to vector<1x8xf32>
    %cst_22 = arith.constant 1.000000e+00 : f32
    %57 = vector.broadcast %cst_22 : f32 to vector<1x8xf32>
    %58 = arith.addf %56, %57 : vector<1x8xf32>
    %cst_23 = arith.constant -4.85203028 : f32
    %59 = vector.broadcast %cst_23 : f32 to vector<1x8xf32>
    %60 = arith.mulf %58, %59 : vector<1x8xf32>
    %61 = math.exp %60 : vector<1x8xf32>
    %cst_24 = arith.constant -4.85203028 : f32
    %62 = vector.broadcast %cst_24 : f32 to vector<1x8xf32>
    %63 = arith.mulf %26, %62 : vector<1x8xf32>
    %64 = math.exp %63 : vector<1x8xf32>
    %cst_25 = arith.constant 1.000000e+00 : f32
    %65 = vector.broadcast %cst_25 : f32 to vector<1x8xf32>
    %66 = arith.subf %61, %65 : vector<1x8xf32>
    %cst_26 = arith.constant -0.9921875 : f32
    %67 = vector.broadcast %cst_26 : f32 to vector<1x8xf32>
    %68 = arith.divf %66, %67 : vector<1x8xf32>
    %cst_27 = arith.constant 1.000000e+00 : f32
    %69 = vector.broadcast %cst_27 : f32 to vector<1x8xf32>
    %70 = arith.subf %64, %69 : vector<1x8xf32>
    %cst_28 = arith.constant -0.9921875 : f32
    %71 = vector.broadcast %cst_28 : f32 to vector<1x8xf32>
    %72 = arith.divf %70, %71 : vector<1x8xf32>
    %73 = arith.cmpi slt, %5, %4 : vector<8x8xi32>
    %cst_29 = arith.constant 1.000000e+00 : f32
    %cst_30 = arith.constant 0.000000e+00 : f32
    %74 = vector.broadcast %cst_29 : f32 to vector<8x8xf32>
    %75 = vector.broadcast %cst_30 : f32 to vector<8x8xf32>
    %76 = arith.select %73, %74, %75 : vector<8x8xi1>, vector<8x8xf32>
    %77 = vector.broadcast %26 : vector<1x8xf32> to vector<8x8xf32>
    %78 = arith.mulf %76, %77 : vector<8x8xf32>
    %cst_31 = arith.constant dense<0.000000e+00> : vector<8xf32>
    %79 = vector.multi_reduction <add>, %78, %cst_31 [1] : vector<8x8xf32> to vector<8xf32>
    %80 = vector.shape_cast %79 : vector<8xf32> to vector<8x1xf32>
    %81 = arith.cmpi slt, %4, %5 : vector<8x8xi32>
    %cst_32 = arith.constant 1.000000e+00 : f32
    %cst_33 = arith.constant 0.000000e+00 : f32
    %82 = vector.broadcast %cst_32 : f32 to vector<8x8xf32>
    %83 = vector.broadcast %cst_33 : f32 to vector<8x8xf32>
    %84 = arith.select %81, %82, %83 : vector<8x8xi1>, vector<8x8xf32>
    %85 = vector.broadcast %24 : vector<8x1xf32> to vector<8x8xf32>
    %86 = arith.mulf %84, %85 : vector<8x8xf32>
    %cst_34 = arith.constant dense<0.000000e+00> : vector<8xf32>
    %87 = vector.multi_reduction <add>, %86, %cst_34 [0] : vector<8x8xf32> to vector<8xf32>
    %88 = vector.shape_cast %87 : vector<8xf32> to vector<1x8xf32>
    %89 = arith.mulf %54, %72 : vector<1x8xf32>
    %90 = vector.broadcast %80 : vector<8x1xf32> to vector<8x8xf32>
    %91 = vector.broadcast %88 : vector<1x8xf32> to vector<8x8xf32>
    %92 = arith.subf %90, %91 : vector<8x8xf32>
    %93 = vector.broadcast %26 : vector<1x8xf32> to vector<8x8xf32>
    %94 = arith.subf %92, %93 : vector<8x8xf32>
    %95 = arith.cmpi slt, %5, %4 : vector<8x8xi32>
    %cst_35 = arith.constant 0.000000e+00 : f32
    %96 = vector.broadcast %cst_35 : f32 to vector<8x8xf32>
    %97 = arith.select %95, %94, %96 : vector<8x8xi1>, vector<8x8xf32>
    %98 = arith.cmpi slt, %5, %4 : vector<8x8xi32>
    %cst_36 = arith.constant -4.85203028 : f32
    %99 = vector.broadcast %cst_36 : f32 to vector<8x8xf32>
    %100 = arith.mulf %97, %99 : vector<8x8xf32>
    %101 = math.exp %100 : vector<8x8xf32>
    %cst_37 = arith.constant 0.000000e+00 : f32
    %102 = vector.broadcast %cst_37 : f32 to vector<8x8xf32>
    %103 = arith.select %98, %101, %102 : vector<8x8xi1>, vector<8x8xf32>
    %104 = vector.broadcast %89 : vector<1x8xf32> to vector<8x8xf32>
    %105 = arith.mulf %103, %104 : vector<8x8xf32>
    %cst_38 = arith.constant dense<0.000000e+00> : vector<8xf32>
    %106 = vector.multi_reduction <add>, %105, %cst_38 [1] : vector<8x8xf32> to vector<8xf32>
    %107 = vector.shape_cast %106 : vector<8xf32> to vector<8x1xf32>
    %108 = vector.broadcast %107 : vector<8x1xf32> to vector<8x8xf32>
    %109 = vector.broadcast %61 : vector<1x8xf32> to vector<8x8xf32>
    %110 = arith.mulf %108, %109 : vector<8x8xf32>
    %111 = vector.broadcast %51 : vector<8x1xf32> to vector<8x8xf32>
    %112 = vector.broadcast %68 : vector<1x8xf32> to vector<8x8xf32>
    %113 = arith.mulf %111, %112 : vector<8x8xf32>
    %114 = arith.addf %110, %113 : vector<8x8xf32>
    %115 = vector.broadcast %56 : vector<1x8xf32> to vector<8x8xf32>
    %116 = vector.broadcast %24 : vector<8x1xf32> to vector<8x8xf32>
    %117 = arith.cmpf olt, %115, %116 : vector<8x8xf32>
    %cst_39 = arith.constant 1.000000e+00 : f32
    %118 = vector.broadcast %cst_39 : f32 to vector<8x8xf32>
    %119 = arith.select %117, %114, %118 : vector<8x8xi1>, vector<8x8xf32>
    %120 = math.log %119 : vector<8x8xf32>
    %cst_40 = arith.constant dense<0.000000e+00> : vector<8xf32>
    %121 = vector.multi_reduction <add>, %120, %cst_40 [1] : vector<8x8xf32> to vector<8xf32>
    %122 = vector.shape_cast %121 : vector<8xf32> to vector<8x1xf32>
    %cst_41 = arith.constant 2.000000e+00 : f32
    %123 = vector.broadcast %cst_41 : f32 to vector<8x8xf32>
    %124 = arith.mulf %11, %123 : vector<8x8xf32>
    %cst_42 = arith.constant 1.000000e+00 : f32
    %125 = vector.broadcast %cst_42 : f32 to vector<8x8xf32>
    %126 = arith.select %15, %124, %125 : vector<8x8xi1>, vector<8x8xf32>
    %127 = math.log %126 : vector<8x8xf32>
    %cst_43 = arith.constant dense<0.000000e+00> : vector<8xf32>
    %128 = vector.multi_reduction <add>, %127, %cst_43 [1] : vector<8x8xf32> to vector<8xf32>
    %129 = vector.shape_cast %128 : vector<8xf32> to vector<8x1xf32>
    %130 = arith.subf %129, %122 : vector<8x1xf32>
    %cst_44 = arith.constant 1.000000e+00 : f32
    %131 = vector.broadcast %cst_44 : f32 to vector<1x8xf32>
    %132 = arith.divf %131, %26 : vector<1x8xf32>
    %133 = arith.cmpi sge, %5, %4 : vector<8x8xi32>
    %cst_45 = arith.constant 1.000000e+00 : f32
    %cst_46 = arith.constant 0.000000e+00 : f32
    %134 = vector.broadcast %cst_45 : f32 to vector<8x8xf32>
    %135 = vector.broadcast %cst_46 : f32 to vector<8x8xf32>
    %136 = arith.select %133, %134, %135 : vector<8x8xi1>, vector<8x8xf32>
    %137 = vector.broadcast %132 : vector<1x8xf32> to vector<8x8xf32>
    %138 = arith.mulf %136, %137 : vector<8x8xf32>
    %cst_47 = arith.constant dense<0.000000e+00> : vector<8xf32>
    %139 = vector.multi_reduction <add>, %138, %cst_47 [1] : vector<8x8xf32> to vector<8xf32>
    %140 = vector.shape_cast %139 : vector<8xf32> to vector<8x1xf32>
    %141 = arith.mulf %130, %140 : vector<8x1xf32>
    %cst_48 = arith.constant dense<0.000000e+00> : vector<1xf32>
    %142 = vector.multi_reduction <add>, %141, %cst_48 [0] : vector<8x1xf32> to vector<1xf32>
    %143 = vector.shape_cast %142 : vector<1xf32> to vector<1x1xf32>
    %cst_49 = arith.constant 0.000000e+00 : f32
    %144 = vector.broadcast %cst_49 : f32 to vector<1x1xf32>
    %145 = arith.subf %144, %143 : vector<1x1xf32>
    %cst_50 = arith.constant 5.000000e-01 : f32
    %146 = vector.broadcast %cst_50 : f32 to vector<1x1xf32>
    %147 = arith.mulf %146, %145 : vector<1x1xf32>
    %cst_51 = arith.constant 0.000000e+00 : f32
    %148 = vector.broadcast %cst_51 : f32 to vector<1x1xf32>
    %149 = arith.addf %148, %147 : vector<1x1xf32>
    %c0_52 = arith.constant 0 : index
    %c0_53 = arith.constant 0 : index
    %150 = vector.load %arg4[%c0_52, %c0_53] : memref<1x1xf32, #tpu.memory_space<vmem>>, vector<1x1xf32>
    tpu.vector_store %arg4[%c0_52, %c0_53], %149 {strides = array<i32>} : memref<1x1xf32, #tpu.memory_space<vmem>>, vector<1x1xf32>,
    return
  }
}

</mosaic_0001>

<llo_original>
// kernel: tpu_custom_call.1
$region0: #{tpu_custom_call.1}
  #allocation0 [shape = 'u32[]', space=smem, size = 0x4, offset = 0x4, fixed_abs, tag = 'smem constant byte address 0x4 - core index']
  #allocation1 [shape = 'u32[144,128]{1,0:T(1,128)}', space=vmem, size = 0x12000, scoped, tag = 'internal scratch']
  %s0 = inlined_call_operand.vmem [shape: f32[8,1], index: 0, kind: input, shape index: {}]
  %s1 = inlined_call_operand.vmem [shape: f32[1,8], index: 1, kind: input, shape index: {}]
  %s2 = inlined_call_operand.vmem [shape: f32[8,1], index: 2, kind: input, shape index: {}]
  %s3 = inlined_call_operand.vmem [shape: f32[1,8], index: 3, kind: input, shape index: {}]
  %s4 = inlined_call_operand.hbm [shape: f32[1,1], index: 4, kind: output, shape index: {}]
  %s5 = sld [smem:[#allocation0]]
  $region26: #{tpu_custom_call.1} parent=0
    _
  %s7 = ssub.s32 1, %s5
  %s8 = scalar_select 0, %s7, %s5
  $region1: #{tpu_custom_call.1} parent=0
    #allocation2 [shape = 'u8[512]{0}', space=vmem, size = 0x400, scoped, tag = 'output window, operand 0, single buffered']
    #allocation3 [shape = 's32[1]{0}', space=sflag, size = 0x4, scoped, tag = 'scoped memory for tpu_custom_call.1']
    %9 = vsyncpa [#allocation3], 0
    // Predicated region
    $region2: #{tpu_custom_call.1} parent=1 // pred_check
      _
    $region3: #{tpu_custom_call.1} parent=1 // pred_check_branch
      %11 = sbr.rel (0) target = $region5
    $region4: #{tpu_custom_call.1} parent=1 // pred_region
      _
    $region5: #{tpu_custom_call.1} parent=1 // pred_fallthru
      _
    // Predicated region
    $region6: #{tpu_custom_call.1} parent=1 // pred_check
      _
    $region7: #{tpu_custom_call.1} parent=1 // pred_check_branch
      %13 = sbr.rel (0) target = $region9
    $region8: #{tpu_custom_call.1} parent=1 // pred_region
      _
    $region9: #{tpu_custom_call.1} parent=1 // pred_fallthru
      _
    // Predicated region
    $region10: #{tpu_custom_call.1} parent=1 // pred_check
      _
    $region11: #{tpu_custom_call.1} parent=1 // pred_check_branch
      %15 = sbr.rel (0) target = $region13
    $region12: #{tpu_custom_call.1} parent=1 // pred_region
      _
    $region13: #{tpu_custom_call.1} parent=1 // pred_fallthru
      _
    // Predicated region
    $region14: #{tpu_custom_call.1} parent=1 // pred_check
      _
    $region15: #{tpu_custom_call.1} parent=1 // pred_check_branch
      %17 = sbr.rel (0) target = $region17
    $region16: #{tpu_custom_call.1} parent=1 // pred_region
      _
    $region17: #{tpu_custom_call.1} parent=1 // pred_fallthru
      _
    %v18 = vld [vmem:[%s0] sm:$0xff]
    %v19 = vld [vmem:[%s1] sm:$0x1]
    %v20 = vld [vmem:[%s2] sm:$0xff]
    %v21 = vld [vmem:[%s3] sm:$0x1]
    %v22 = vlaneseq
    %v23 = vshrl.u32 %v22, 7
    %v24 = vlaneseq
    %v25 = vand.u32 %v24, 127
    %v26 = vcvt.s32.f32 %v23
    %v27 = vcvt.s32.f32 %v25
    %vm28 = vcmp.ne.s32.totalorder %v23, %v25
    %30 = vset.pattern.permute.xlu0 0
    %31 = vperm.xlu0 %30, %v18
    %v32 = vpop.permute.xlu0 %31
    %v35 = vlaneseq
    %v36 = vshrl.u32 %v35, 7
    %v37 = vsub.s32 0, %v36
    %v38 = vrot.slane %v19, %v37
    %v40 = vmul.f32 %v32, %v38
    %42 = vset.pattern.permute.xlu0 0
    %43 = vperm.xlu0 %42, %v20
    %v44 = vpop.permute.xlu0 %43
    %v47 = vlaneseq
    %v48 = vshrl.u32 %v47, 7
    %v49 = vsub.s32 0, %v48
    %v50 = vrot.slane %v21, %v49
    %vm52 = vcmp.eq.f32.partialorder %v44, %v50
    %vm53 = vmand %vm52, %vm28
    %v54 = vsel %vm52, 1.0, 0.0
    %vm55 = vcmask 64512
    %v56 = vsel %vm55, %v54, 0.0
    %57 = vadd.xlane.f32.xlu0 %v56
    %v58 = vpop.xlane.xlu0 %57
    %v59 = vrot.slane %v56, 4
    %v60 = vadd.f32 %v56, %v59
    %v61 = vrot.slane %v60, 2
    %v62 = vadd.f32 %v60, %v61
    %v63 = vrot.slane %v62, 1
    %v64 = vadd.f32 %v62, %v63
    %v65 = vsub.f32 %v58, 1.0
    %v66 = vsub.f32 %v64, 1.0
    %vm67 = vcmp.lt.s32.totalorder %v25, %v23
    %v68 = vsub.f32 7.0, %v27
    %v69 = vsub.f32 8.0, %v27
    %v70 = vsel %vm67, %v68, %v69
    %v71 = vmul.f32 %v70, -0.6931472
    %v72 = vmul.f32 %v71, 1.442695
    %v73 = vpow.pop %v72
    %v74 = vsel %vm28, %v73, 0.0
    %vm75 = vcmp.lt.s32.totalorder %v23, %v25
    %v76 = vsub.f32 7.0, %v26
    %v77 = vsub.f32 8.0, %v26
    %v78 = vsel %vm75, %v76, %v77
    %v79 = vmul.f32 %v78, -0.6931472
    %v80 = vmul.f32 %v79, 1.442695
    %v81 = vpow.pop %v80
    %v82 = vsel %vm28, %v81, 0.0
    %v83 = vmul.f32 %v40, %v74
    %v84 = vsel %vm55, %v83, 0.0
    %85 = vadd.xlane.f32.xlu0 %v84
    %v86 = vpop.xlane.xlu0 %85
    %v87 = vmul.f32 %v40, %v82
    %v88 = vsel %vm55, %v87, 0.0
    %v89 = vrot.slane %v88, 4
    %v90 = vadd.f32 %v88, %v89
    %v91 = vrot.slane %v90, 2
    %v92 = vadd.f32 %v90, %v91
    %v93 = vrot.slane %v92, 1
    %v94 = vadd.f32 %v92, %v93
    %v95 = vadd.f32 %v27, 1.0
    %v96 = vmul.f32 %v95, -4.8520303
    %v97 = vmul.f32 %v96, 1.442695
    %v98 = vpow.pop %v97
    %v99 = vmul.f32 %v66, -4.8520303
    %v100 = vmul.f32 %v99, 1.442695
    %v101 = vpow.pop %v100
    %v102 = vsub.f32 %v98, 1.0
    %v103 = vrcp.pop -0.9921875
    %v104 = vmul.f32 %v102, %v103
    %v105 = vsub.f32 %v101, 1.0
    %v106 = vmul.f32 %v105, %v103
    %v107 = vsel %vm67, 1.0, 0.0
    %v108 = vmul.f32 %v107, %v66
    %v109 = vsel %vm55, %v108, 0.0
    %110 = vadd.xlane.f32.xlu0 %v109
    %v111 = vpop.xlane.xlu0 %110
    %v112 = vsel %vm75, 1.0, 0.0
    %v113 = vmul.f32 %v112, %v65
    %v114 = vsel %vm55, %v113, 0.0
    %v115 = vrot.slane %v114, 4
    %v116 = vadd.f32 %v114, %v115
    %v117 = vrot.slane %v116, 2
    %v118 = vadd.f32 %v116, %v117
    %v119 = vrot.slane %v118, 1
    %v120 = vadd.f32 %v118, %v119
    %v121 = vmul.f32 %v94, %v106
    %v122 = vsub.f32 %v111, %v120
    %v123 = vsub.f32 %v122, %v66
    %v124 = vsel %vm67, %v123, 0.0
    %v125 = vmul.f32 %v124, -4.8520303
    %v126 = vmul.f32 %v125, 1.442695
    %v127 = vpow.pop %v126
    %v128 = vsel %vm67, %v127, 0.0
    %v129 = vmul.f32 %v128, %v121
    %v130 = vsel %vm55, %v129, 0.0
    %131 = vadd.xlane.f32.xlu0 %v130
    %v132 = vpop.xlane.xlu0 %131
    %v133 = vmul.f32 %v132, %v98
    %v134 = vmul.f32 %v86, %v104
    %v135 = vadd.f32 %v133, %v134
    %vm136 = vcmp.lt.f32.partialorder %v27, %v65
    %v137 = vsel %vm136, %v135, 1.0
    %v138 = vlog2.pop %v137
    %v139 = vmul.f32 %v138, 0.6931472
    %v140 = vsel %vm55, %v139, 0.0
    %141 = vadd.xlane.f32.xlu0 %v140
    %v142 = vpop.xlane.xlu0 %141
    %v143 = vmul.f32 %v40, 2.0
    %v144 = vsel %vm53, %v143, 1.0
    %v145 = vlog2.pop %v144
    %v146 = vmul.f32 %v145, 0.6931472
    %v147 = vsel %vm55, %v146, 0.0
    %148 = vadd.xlane.f32.xlu0 %v147
    %v149 = vpop.xlane.xlu0 %148
    %v150 = vsub.f32 %v149, %v142
    %v151 = vrcp.pop %v66
    %v152 = vmul.f32 1.0, %v151
    %vm153 = vcmp.ge.s32.totalorder %v25, %v23
    %v154 = vsel %vm153, 1.0, 0.0
    %v155 = vmul.f32 %v154, %v152
    %v156 = vsel %vm55, %v155, 0.0
    %157 = vadd.xlane.f32.xlu0 %v156
    %v158 = vpop.xlane.xlu0 %157
    %v159 = vmul.f32 %v150, %v158
    %v160 = vrot.slane %v159, 4
    %v161 = vadd.f32 %v159, %v160
    %v162 = vrot.slane %v161, 2
    %v163 = vadd.f32 %v161, %v162
    %v164 = vrot.slane %v163, 1
    %v165 = vadd.f32 %v163, %v164
    %v166 = vsub.f32 0.0, %v165
    %v167 = vmul.f32 %v166, 0.5
    %v168 = vadd.f32 %v167, 0.0
    %vm169 = vcmask 0
    %170 = vst.msk [vmem:[#allocation2] sm:$0x1] %vm169, %v168
    // Predicated region
    $region18: #{tpu_custom_call.1} parent=1 // pred_check
      _
    $region19: #{tpu_custom_call.1} parent=1 // pred_check_branch
      %172 = sbr.rel (0) target = $region21
    $region20: #{tpu_custom_call.1} parent=1 // pred_region
      %s174 = ssub.s32 16, 16
      %175 = vsyncadd [#allocation3], %s174
      %s177 = sshll.u32 [#allocation2], 4
      %s178 = int_to_ptr.vmem [resolvable:$true] %s177
      %180 = dma.vmem_to_hbm [thread:$0]  %s178, 16, %s4, [#allocation3]
    $region21: #{tpu_custom_call.1} parent=1 // pred_fallthru
      _
    // Predicated region
    $region22: #{tpu_custom_call.1} parent=1 // pred_check
      _
    $region23: #{tpu_custom_call.1} parent=1 // pred_check_branch
      %182 = sbr.rel (0) target = $region25
    $region24: #{tpu_custom_call.1} parent=1 // pred_region
      %183 = dma.done [#allocation3], 16
    $region25: #{tpu_custom_call.1} parent=1 // pred_fallthru
      _
    %184 = vsyncpa [#allocation3], 1

</llo_original>
